<compile_context>
chip_gen: v7x
topology: tpu7x:2x2x1
jax: 0.10.0
libtpu: 0.0.40
codegen_flags: <defaults>
</compile_context>

<pallas_src>
import functools

import jax
import jax.numpy as jnp
from jax import lax
from jax.experimental import pallas as pl
from jax.experimental.pallas import tpu as pltpu


LANE = 128


# ---------------------------------------------------------------------------
# Small helpers
# ---------------------------------------------------------------------------
def _round_up(x, m):
    return (x + m - 1) // m * m


def _pad2d(x, rows, cols):
    pr, pc = rows - x.shape[0], cols - x.shape[1]
    if pr == 0 and pc == 0:
        return x
    return jnp.pad(x, ((0, pr), (0, pc)))


def _vmem_capacity_bytes():
    try:
        return int(pltpu.get_tpu_info().vmem_capacity_bytes)
    except Exception:
        return 128 * 1024 * 1024


def _vmem_limit_bytes():
    # Stay well inside physical VMEM on every generation (64 MiB/TC on v7x).
    return min(_vmem_capacity_bytes() * 3 // 4, 100 * 1024 * 1024)


def _choose_tile(n, candidates=(512, 256, 128)):
    for c in candidates:
        if n % c == 0:
            return c
    return LANE


def _choose_tm(m, max_tm):
    """Largest TM (multiple of 8, <= max_tm) that minimizes M padding."""
    mp8 = _round_up(max(m, 1), 8)
    start = max(8, min(max_tm, mp8))
    start -= start % 8
    best_tm, best_mp = 8, mp8
    for tm in range(start, 7, -8):
        mp = _round_up(m, tm)
        if (mp, -tm) < (best_mp, -best_tm):
            best_tm, best_mp = tm, mp
    return best_tm, best_mp


# ---------------------------------------------------------------------------
# Kernel 1: tiled matmul + BN epilogue (+ optional residual / ReLU)
# Used for the 1x1 convs (conv1, conv3, shortcut conv).
# ---------------------------------------------------------------------------
def _matmul_bn_act_kernel(*refs, apply_relu, has_residual):
    if has_residual:
        x_ref, w_ref, scale_ref, bias_ref, res_ref, o_ref, acc_ref = refs
    else:
        x_ref, w_ref, scale_ref, bias_ref, o_ref, acc_ref = refs

    k = pl.program_id(2)

    @pl.when(k == 0)
    def _init():
        acc_ref[...] = jnp.zeros_like(acc_ref)

    acc_ref[...] += jnp.dot(
        x_ref[...], w_ref[...], preferred_element_type=jnp.float32
    )

    # Epilogue only on the final K step: keeps the inner loop pure MXU.
    @pl.when(k == pl.num_programs(2) - 1)
    def _epilogue():
        out = acc_ref[...] * scale_ref[...] + bias_ref[...]
        if has_residual:
            out = out + res_ref[...].astype(jnp.float32)
        if apply_relu:
            out = jnp.maximum(out, 0.0)
        o_ref[...] = out.astype(o_ref.dtype)


def matmul_bn_act(x2d, w, scale, bias, *, apply_relu, residual=None,
                  out_dtype=jnp.bfloat16):
    """Fused (X @ W) * scale + bias [+ residual] [+ relu], tiled & pipelined.

    Operands are fed as bf16 (f32 accumulation in VMEM scratch).  K and N are
    zero-padded to multiples of 128 (full-width MXU passes, lane-dense stores);
    the result has shape (M, round_up(N, 128)) and callers may chain the padded
    slab directly into the next matmul.
    """
    M, K = x2d.shape
    K2, N = w.shape
    assert K == K2
    has_residual = residual is not None
    out_isz = jnp.dtype(out_dtype).itemsize

    vmem_limit = _vmem_limit_bytes()
    budget = int(vmem_limit * 0.9)
    cap = _vmem_capacity_bytes()

    # Lane-dense N, MXU-aligned K (both zero-padded).
    Np = _round_up(N, LANE)
    TN = _choose_tile(Np)
    Kp = _round_up(K, LANE)
    TK = _choose_tile(Kp)

    def footprint(tm, tk, tn):
        fp = 2 * (tm * tk + tk * tn) * 2          # bf16 x/w, double-buffered
        fp += tm * tn * 4                          # f32 accumulator scratch
        fp += 2 * tm * tn * out_isz                # output, double-buffered
        fp += 2 * 2 * tn * 4 * 2                   # scale / bias
        if has_residual:
            fp += 2 * tm * tn * 2
        return fp

    max_tm = 1024 if cap >= 96 * 1024 * 1024 else 512
    TM, Mp = _choose_tm(M, max_tm)
    while footprint(TM, TK, TN) > budget and max_tm > 8:
        max_tm //= 2
        TM, Mp = _choose_tm(M, max_tm)

    gm, gn, gk = Mp // TM, Np // TN, Kp // TK

    # Keep both v7x TensorCores busy when a layer yields a single output tile.
    if gm * gn == 1:
        if TN >= 256:
            TN //= 2
        elif Mp >= 16 and (Mp // 2) % 8 == 0:
            TM = Mp // 2
        gm, gn = Mp // TM, Np // TN

    # ---- operand prep: bf16 matmul operands, f32 per-channel scale/bias ----
    xp = _pad2d(x2d.astype(jnp.bfloat16), Mp, Kp)
    wp = _pad2d(w.astype(jnp.bfloat16), Kp, Np)
    scale_p = _pad2d(scale.reshape(1, N).astype(jnp.float32), 1, Np)
    bias_p = _pad2d(bias.reshape(1, N).astype(jnp.float32), 1, Np)

    in_specs = [
        pl.BlockSpec((TM, TK), lambda i, j, k: (i, k)),
        pl.BlockSpec((TK, TN), lambda i, j, k: (k, j)),
        pl.BlockSpec((1, TN), lambda i, j, k: (0, j)),
        pl.BlockSpec((1, TN), lambda i, j, k: (0, j)),
    ]
    args = [xp, wp, scale_p, bias_p]
    if has_residual:
        assert residual.shape[0] == M and residual.shape[1] in (N, Np)
        res_p = _pad2d(residual.astype(jnp.bfloat16), Mp, Np)
        in_specs.append(pl.BlockSpec((TM, TN), lambda i, j, k: (i, j)))
        args.append(res_p)

    # Advisory cost: count per-tile re-reads (x streamed gn times, w gm times).
    bytes_accessed = (xp.size * 2 * gn + wp.size * 2 * gm
                      + (scale_p.size + bias_p.size) * 4 * gm
                      + Mp * Np * out_isz
                      + (Mp * Np * 2 if has_residual else 0))

    kernel = functools.partial(
        _matmul_bn_act_kernel, apply_relu=apply_relu, has_residual=has_residual
    )
    out = pl.pallas_call(
        kernel,
        out_shape=jax.ShapeDtypeStruct((Mp, Np), out_dtype),
        grid_spec=pltpu.PrefetchScalarGridSpec(
            num_scalar_prefetch=0,
            grid=(gm, gn, gk),
            in_specs=in_specs,
            out_specs=pl.BlockSpec((TM, TN), lambda i, j, k: (i, j)),
            scratch_shapes=[pltpu.VMEM((TM, TN), jnp.float32)],
        ),
        compiler_params=pltpu.CompilerParams(
            dimension_semantics=("parallel", "parallel", "arbitrary"),
            vmem_limit_bytes=vmem_limit,
        ),
        cost_estimate=pl.CostEstimate(
            flops=2 * M * K * N,
            transcendentals=0,
            bytes_accessed=bytes_accessed,
        ),
    )(*args)
    return out[:M]


# ---------------------------------------------------------------------------
# Kernel 2: implicit-GEMM 3x3 conv (pad=1, stride 1 or 2) + BN + ReLU
# ---------------------------------------------------------------------------
def _conv3x3_bn_relu_kernel(x_ref, w_ref, scale_ref, bias_ref, o_ref, *,
                            stride, Ho, Wo, Cin):
    # x_ref : (stride*stride, Hq, Wq, Cin)  phase-split, spatially padded input
    # w_ref : (9, Cin, TN)                  taps stacked on the leading axis
    # o_ref : (1, Ho, Wo, TN)
    tn = o_ref.shape[-1]
    acc = jnp.zeros((Ho * Wo, tn), jnp.float32)
    for kh in range(3):                      # static unroll: 9 MXU passes
        for kw in range(3):
            ph = (kh % stride) * stride + (kw % stride)
            oh, ow = kh // stride, kw // stride
            win = x_ref[ph, oh:oh + Ho, ow:ow + Wo, :]          # (Ho, Wo, Cin)
            acc = acc + jnp.dot(win.reshape(Ho * Wo, Cin),
                                w_ref[kh * 3 + kw],
                                preferred_element_type=jnp.float32)
    out = acc * scale_ref[...] + bias_ref[...]
    out = jnp.maximum(out, 0.0)
    o_ref[...] = out.reshape(1, Ho, Wo, tn).astype(o_ref.dtype)


def _conv3x3_im2col_fallback(x_nhwc, w_oihw, scale, bias, stride):
    """Fallback when a per-image block would not fit VMEM: materialized im2col
    streamed through the generic matmul kernel."""
    B, H, W, Cin = x_nhwc.shape
    Cout, cin_real = w_oihw.shape[0], w_oihw.shape[1]
    Ho = (H + 2 - 3) // stride + 1
    Wo = (W + 2 - 3) // stride + 1
    xpad = jnp.pad(x_nhwc, ((0, 0), (1, 1), (1, 1), (0, 0)))
    cols = [xpad[:, kh:kh + stride * Ho:stride, kw:kw + stride * Wo:stride, :]
            for kh in range(3) for kw in range(3)]
    patches = jnp.concatenate(cols, axis=-1).reshape(B * Ho * Wo, 9 * Cin)
    w_t = jnp.transpose(w_oihw, (2, 3, 1, 0)).astype(jnp.float32)
    wfull = jnp.zeros((3, 3, Cin, Cout), jnp.float32).at[:, :, :cin_real, :].set(w_t)
    o = matmul_bn_act(patches, wfull.reshape(9 * Cin, Cout), scale, bias,
                      apply_relu=True, out_dtype=jnp.bfloat16)
    return o.reshape(B, Ho, Wo, _round_up(Cout, LANE))


def conv3x3_bn_relu(x_nhwc, w_oihw, scale, bias, stride):
    """Implicit-GEMM fused 3x3 conv (pad=1) + BN + ReLU.

    x_nhwc : (B, H, W, Cin) bf16, Cin lane-padded (multiple of 128) with zeros
             in the padded channels (chained straight from conv1's output).
    w_oihw : (Cout, Cin_real, 3, 3) PyTorch-layout weights.
    Returns (B, Ho, Wo, round_up(Cout, 128)) bf16 (padded channels are zero).
    """
    B, H, W, Cin = x_nhwc.shape
    Cout, cin_real = w_oihw.shape[0], w_oihw.shape[1]
    assert Cin % LANE == 0 and cin_real <= Cin
    assert stride in (1, 2)

    Ho = (H + 2 - 3) // stride + 1
    Wo = (W + 2 - 3) // stride + 1
    Np = _round_up(Cout, LANE)
    TN = min(_choose_tile(Np), 256)
    gn = Np // TN
    s2 = stride * stride
    off = (2 + stride - 1) // stride          # max in-phase tap offset
    Hq, Wq = Ho + off, Wo + off

    vmem_limit = _vmem_limit_bytes()
    fp = (2 * (s2 * Hq * Wq * Cin * 2 + 9 * Cin * TN * 2 + Ho * Wo * TN * 2)
          + Ho * Wo * TN * 4 + 2 * Ho * Wo * Cin * 2)
    if fp > int(vmem_limit * 0.8):
        return _conv3x3_im2col_fallback(x_nhwc, w_oihw, scale, bias, stride)

    # One spatial pad + (stride 2 only) a phase split: ~2 extra HBM copies of
    # the activation, vs. the ~9x slab a materialized im2col writes & re-reads.
    xpad = jnp.pad(x_nhwc, ((0, 0), (1, 1), (1, 1), (0, 0)))
    if stride == 1:
        xph = xpad                                             # (B, Hq, Wq, Cin)
    else:
        phases = []
        for a in range(stride):
            for b in range(stride):
                p = xpad[:, a::stride, b::stride, :][:, :Hq, :Wq, :]
                dh, dw = Hq - p.shape[1], Wq - p.shape[2]
                if dh or dw:
                    p = jnp.pad(p, ((0, 0), (0, dh), (0, dw), (0, 0)))
                phases.append(p)
        xph = jnp.stack(phases, axis=1).reshape(B * s2, Hq, Wq, Cin)

    # Taps-major weight layout, zero-padded to the padded channel counts.
    w_t = jnp.transpose(w_oihw, (2, 3, 1, 0)).reshape(9, cin_real, Cout)
    wp = jnp.zeros((9, Cin, Np), jnp.bfloat16)
    wp = wp.at[:, :cin_real, :Cout].set(w_t.astype(jnp.bfloat16))
    scale_p = _pad2d(scale.reshape(1, Cout).astype(jnp.float32), 1, Np)
    bias_p = _pad2d(bias.reshape(1, Cout).astype(jnp.float32), 1, Np)

    kernel = functools.partial(_conv3x3_bn_relu_kernel, stride=stride,
                               Ho=Ho, Wo=Wo, Cin=Cin)
    bytes_accessed = xph.size * 2 + B * gn * wp.size * 2 + B * Ho * Wo * Np * 2

    out = pl.pallas_call(
        kernel,
        out_shape=jax.ShapeDtypeStruct((B, Ho, Wo, Np), jnp.bfloat16),
        grid_spec=pltpu.PrefetchScalarGridSpec(
            num_scalar_prefetch=0,
            grid=(B, gn),
            in_specs=[
                # activation block index ignores j -> fetched once per image
                pl.BlockSpec((s2, Hq, Wq, Cin), lambda b, j: (b, 0, 0, 0)),
                pl.BlockSpec((9, Cin, TN), lambda b, j: (0, 0, j)),
                pl.BlockSpec((1, TN), lambda b, j: (0, j)),
                pl.BlockSpec((1, TN), lambda b, j: (0, j)),
            ],
            out_specs=pl.BlockSpec((1, Ho, Wo, TN), lambda b, j: (b, 0, 0, j)),
        ),
        compiler_params=pltpu.CompilerParams(
            dimension_semantics=("parallel", "parallel"),
            vmem_limit_bytes=vmem_limit,
        ),
        cost_estimate=pl.CostEstimate(
            flops=2 * B * Ho * Wo * 9 * cin_real * Cout,
            transcendentals=0,
            bytes_accessed=bytes_accessed,
        ),
    )(xph, wp, scale_p, bias_p)
    return out


# ---------------------------------------------------------------------------
# Glue: BN folding, parameter init
# ---------------------------------------------------------------------------
def fold_bn(gamma, beta, mean, var, eps=1e-5):
    scale = gamma / jnp.sqrt(var + eps)
    bias = beta - mean * scale
    return scale, bias


def make_params(key, in_planes, planes, stride):
    expansion = 4
    ks = jax.random.split(key, 16)
    p = {}
    # conv weights (PyTorch layout: Cout, Cin, kH, kW)
    p["w1"] = 0.1 * jax.random.normal(ks[0], (planes, in_planes, 1, 1), jnp.float32)
    p["w2"] = 0.1 * jax.random.normal(ks[1], (planes, planes, 3, 3), jnp.float32)
    p["w3"] = 0.1 * jax.random.normal(ks[2], (expansion * planes, planes, 1, 1), jnp.float32)

    def bn(kg, kb, km, kv, c):
        return (1.0 + 0.1 * jax.random.normal(kg, (c,), jnp.float32),
                0.1 * jax.random.normal(kb, (c,), jnp.float32),
                0.1 * jax.random.normal(km, (c,), jnp.float32),
                1.0 + 0.1 * jax.random.uniform(kv, (c,), jnp.float32))

    p["bn1"] = bn(ks[3], ks[4], ks[5], ks[6], planes)
    p["bn2"] = bn(ks[7], ks[8], ks[9], ks[10], planes)
    p["bn3"] = bn(ks[11], ks[12], ks[13], ks[14], expansion * planes)
    p["has_shortcut"] = (stride != 1) or (in_planes != expansion * planes)
    if p["has_shortcut"]:
        ks2 = jax.random.split(ks[15], 5)
        p["ws"] = 0.1 * jax.random.normal(
            ks2[0], (expansion * planes, in_planes, 1, 1), jnp.float32)
        p["bns"] = bn(ks2[1], ks2[2], ks2[3], ks2[4], expansion * planes)
    return p


# ---------------------------------------------------------------------------
# Bottleneck forward (NCHW in / NCHW out, matching PyTorch semantics)
# ---------------------------------------------------------------------------
def bottleneck_forward(x_nchw, params, stride):
    B, Cin, H, W = x_nchw.shape
    x = jnp.transpose(x_nchw, (0, 2, 3, 1))            # NHWC
    x2d = x.reshape(B * H * W, Cin)

    planes = params["w1"].shape[0]
    cout = params["w3"].shape[0]                       # 4 * planes

    # conv1 (1x1) + bn1 + relu  -> lane-padded bf16 slab (padded channels = 0)
    w1 = params["w1"][:, :, 0, 0].T                    # (Cin, planes)
    s1, b1 = fold_bn(*params["bn1"])
    o1p = matmul_bn_act(x2d, w1, s1, b1, apply_relu=True, out_dtype=jnp.bfloat16)
    Cp = o1p.shape[1]
    o1 = o1p.reshape(B, H, W, Cp)                      # chained un-sliced

    # conv2 (3x3, stride, pad=1) + bn2 + relu — implicit GEMM, no im2col slab
    s2, b2 = fold_bn(*params["bn2"])
    o2 = conv3x3_bn_relu(o1, params["w2"], s2, b2, stride)   # (B,Ho,Wo,Cp2)
    _, Ho, Wo, Cp2 = o2.shape
    o2_2d = o2.reshape(B * Ho * Wo, Cp2)

    # shortcut -> (B*Ho*Wo, *) bf16
    if params["has_shortcut"]:
        # TODO(synk): the strided spatial slice below is still an XLA-side copy;
        # folding the stride into the shortcut matmul's index_map would need
        # per-row gathers (pl.Element) and is not worth it at these sizes.
        xs = x[:, ::stride, ::stride, :]               # (B, Ho, Wo, Cin)
        ws = params["ws"][:, :, 0, 0].T                # (Cin, 4*planes)
        ss, bs = fold_bn(*params["bns"])
        sc = matmul_bn_act(xs.reshape(B * Ho * Wo, Cin), ws, ss, bs,
                           apply_relu=False, out_dtype=jnp.bfloat16)
    else:
        assert stride == 1 and Cin == cout, "identity shortcut shape mismatch"
        sc = x2d.astype(jnp.bfloat16)

    # conv3 (1x1) + bn3 + residual add + relu, all fused in one kernel.
    # Feed the padded o2 slab directly; zero-pad w3's input rows to match.
    w3 = params["w3"][:, :, 0, 0].T                    # (planes, 4*planes)
    w3p = jnp.zeros((Cp2, cout), jnp.float32).at[:planes].set(w3)
    s3, b3 = fold_bn(*params["bn3"])
    out2d = matmul_bn_act(o2_2d, w3p, s3, b3, apply_relu=True, residual=sc,
                          out_dtype=jnp.float32)

    out = out2d[:, :cout].reshape(B, Ho, Wo, cout)
    return jnp.transpose(out, (0, 3, 1, 2))            # back to NCHW


# ---------------------------------------------------------------------------
# Pure-JAX reference (f32, lax.conv) for a loose correctness check
# ---------------------------------------------------------------------------
def _ref_bn(y, bn, eps=1e-5):
    g, b, m, v = bn
    g, b, m, v = (t[None, :, None, None] for t in (g, b, m, v))
    return (y - m) / jnp.sqrt(v + eps) * g + b


def bottleneck_reference(x, params, stride):
    def conv(inp, w, s, p):
        return lax.conv_general_dilated(
            inp, w, (s, s), [(p, p), (p, p)],
            dimension_numbers=("NCHW", "OIHW", "NCHW"))
    out = jax.nn.relu(_ref_bn(conv(x, params["w1"], 1, 0), params["bn1"]))
    out = jax.nn.relu(_ref_bn(conv(out, params["w2"], stride, 1), params["bn2"]))
    out = _ref_bn(conv(out, params["w3"], 1, 0), params["bn3"])
    if params["has_shortcut"]:
        sc = _ref_bn(conv(x, params["ws"], stride, 0), params["bns"])
    else:
        sc = x
    return jax.nn.relu(out + sc)


if __name__ == "__main__":
    key = jax.random.PRNGKey(0)
    k_in, k_par = jax.random.split(key)

    in_planes, planes, stride = 4, 4, 2
    B, H, W = 2, 16, 16
    x = jax.random.normal(k_in, (B, in_planes, H, W), jnp.float32)   # NCHW
    params = make_params(k_par, in_planes, planes, stride)

    out = bottleneck_forward(x, params, stride)
    out = jax.block_until_ready(out)

    expected_shape = (B, 4 * planes, H // stride, W // stride)
    assert out.shape == expected_shape, (out.shape, expected_shape)
    assert bool(jnp.all(out >= 0.0)), "final ReLU violated"
    assert bool(jnp.all(jnp.isfinite(out))), "non-finite output"

    ref = jax.block_until_ready(bottleneck_reference(x, params, stride))
    assert bool(jnp.allclose(out, ref, rtol=5e-2, atol=5e-2)), (
        "mismatch vs f32 reference: max |diff| = %f"
        % float(jnp.max(jnp.abs(out - ref))))

    print("KERNEL_OK")
</pallas_src>

<mosaic_0001>
module attributes {stable_mosaic.version = 11 : i64} {
  func.func @_matmul_bn_act_kernel(%arg0: i32, %arg1: i32, %arg2: i32, %arg3: memref<256x128xbf16, #tpu.memory_space<vmem>>, %arg4: memref<128x128xbf16, #tpu.memory_space<vmem>>, %arg5: memref<1x128xf32, #tpu.memory_space<vmem>>, %arg6: memref<1x128xf32, #tpu.memory_space<vmem>>, %arg7: memref<256x128xbf16, #tpu.memory_space<vmem>>, %arg8: memref<256x128xf32, #tpu.memory_space<vmem>>) attributes {dimension_semantics = [#tpu.dimension_semantics<parallel>, #tpu.dimension_semantics<parallel>, #tpu.dimension_semantics<arbitrary>], iteration_bounds = array<i64: 2, 1, 1>, scalar_prefetch = 0 : i64, scratch_operands = 1 : i64, tpu.core_type = #tpu.core_type<tc>, window_params = [{transform_indices = @transform_0, window_bounds = array<i64: 256, 128>}, {transform_indices = @transform_1, window_bounds = array<i64: 128, 128>}, {transform_indices = @transform_2, window_bounds = array<i64: 1, 128>}, {transform_indices = @transform_3, window_bounds = array<i64: 1, 128>}, {transform_indices = @transform_4, window_bounds = array<i64: 256, 128>}]} {
    %c0_i32 = arith.constant 0 : i32
    %0 = arith.cmpi eq, %arg2, %c0_i32 : i32
    %1 = arith.extui %0 : i1 to i32
    %c0_i32_0 = arith.constant 0 : i32
    %2 = arith.cmpi ne, %1, %c0_i32_0 : i32
    scf.if %2 {
      %cst_10 = arith.constant 0.000000e+00 : f32
      %12 = vector.broadcast %cst_10 : f32 to vector<256x128xf32>
      %c0_11 = arith.constant 0 : index
      %c0_12 = arith.constant 0 : index
      %13 = vector.load %arg8[%c0_11, %c0_12] : memref<256x128xf32, #tpu.memory_space<vmem>>, vector<256x128xf32>
      tpu.vector_store %arg8[%c0_11, %c0_12], %12 {strides = array<i32>} : memref<256x128xf32, #tpu.memory_space<vmem>>, vector<256x128xf32>,
    } else {
    }
    %c0 = arith.constant 0 : index
    %c0_1 = arith.constant 0 : index
    %3 = vector.load %arg8[%c0, %c0_1] : memref<256x128xf32, #tpu.memory_space<vmem>>, vector<256x128xf32>
    %c0_2 = arith.constant 0 : index
    %c0_3 = arith.constant 0 : index
    %4 = vector.load %arg3[%c0_2, %c0_3] : memref<256x128xbf16, #tpu.memory_space<vmem>>, vector<256x128xbf16>
    %c0_4 = arith.constant 0 : index
    %c0_5 = arith.constant 0 : index
    %5 = vector.load %arg4[%c0_4, %c0_5] : memref<128x128xbf16, #tpu.memory_space<vmem>>, vector<128x128xbf16>
    %cst = arith.constant dense<0.000000e+00> : vector<256x128xf32>
    %6 = tpu.matmul %4, %5, %cst {dimension_numbers = #tpu.dot_dimension_numbers<[1], [0], [0], [1], [0, 0, 1, 1], [], []>} : vector<256x128xbf16>, vector<128x128xbf16>, vector<256x128xf32> -> vector<256x128xf32>
    %7 = arith.addf %3, %6 : vector<256x128xf32>
    %c0_6 = arith.constant 0 : index
    %c0_7 = arith.constant 0 : index
    %8 = vector.load %arg8[%c0_6, %c0_7] : memref<256x128xf32, #tpu.memory_space<vmem>>, vector<256x128xf32>
    tpu.vector_store %arg8[%c0_6, %c0_7], %7 {strides = array<i32>} : memref<256x128xf32, #tpu.memory_space<vmem>>, vector<256x128xf32>,
    %c0_i32_8 = arith.constant 0 : i32
    %9 = arith.cmpi eq, %arg2, %c0_i32_8 : i32
    %10 = arith.extui %9 : i1 to i32
    %c0_i32_9 = arith.constant 0 : i32
    %11 = arith.cmpi ne, %10, %c0_i32_9 : i32
    scf.if %11 {
      %c0_10 = arith.constant 0 : index
      %c0_11 = arith.constant 0 : index
      %12 = vector.load %arg8[%c0_10, %c0_11] : memref<256x128xf32, #tpu.memory_space<vmem>>, vector<256x128xf32>
      %c0_12 = arith.constant 0 : index
      %c0_13 = arith.constant 0 : index
      %13 = vector.load %arg5[%c0_12, %c0_13] : memref<1x128xf32, #tpu.memory_space<vmem>>, vector<1x128xf32>
      %14 = vector.broadcast %13 : vector<1x128xf32> to vector<256x128xf32>
      %15 = arith.mulf %12, %14 : vector<256x128xf32>
      %c0_14 = arith.constant 0 : index
      %c0_15 = arith.constant 0 : index
      %16 = vector.load %arg6[%c0_14, %c0_15] : memref<1x128xf32, #tpu.memory_space<vmem>>, vector<1x128xf32>
      %17 = vector.broadcast %16 : vector<1x128xf32> to vector<256x128xf32>
      %18 = arith.addf %15, %17 : vector<256x128xf32>
      %cst_16 = arith.constant 0.000000e+00 : f32
      %19 = vector.broadcast %cst_16 : f32 to vector<256x128xf32>
      %20 = arith.maximumf %18, %19 : vector<256x128xf32>
      %21 = arith.truncf %20 : vector<256x128xf32> to vector<256x128xbf16>
      %c0_17 = arith.constant 0 : index
      %c0_18 = arith.constant 0 : index
      %22 = vector.load %arg7[%c0_17, %c0_18] : memref<256x128xbf16, #tpu.memory_space<vmem>>, vector<256x128xbf16>
      tpu.vector_store %arg7[%c0_17, %c0_18], %21 {strides = array<i32>} : memref<256x128xbf16, #tpu.memory_space<vmem>>, vector<256x128xbf16>,
    } else {
    }
    return
  }
  func.func @transform_0(%arg0: i32, %arg1: i32, %arg2: i32) -> (i32, i32) {
    %c0_i32 = arith.constant 0 : i32
    return %arg0, %arg2 : i32, i32
  }
  func.func @transform_1(%arg0: i32, %arg1: i32, %arg2: i32) -> (i32, i32) {
    %c0_i32 = arith.constant 0 : i32
    return %arg2, %arg1 : i32, i32
  }
  func.func @transform_2(%arg0: i32, %arg1: i32, %arg2: i32) -> (i32, i32) {
    %c0_i32 = arith.constant 0 : i32
    %c0_i32_0 = arith.constant 0 : i32
    return %c0_i32, %arg1 : i32, i32
  }
  func.func @transform_3(%arg0: i32, %arg1: i32, %arg2: i32) -> (i32, i32) {
    %c0_i32 = arith.constant 0 : i32
    %c0_i32_0 = arith.constant 0 : i32
    return %c0_i32, %arg1 : i32, i32
  }
  func.func @transform_4(%arg0: i32, %arg1: i32, %arg2: i32) -> (i32, i32) {
    %c0_i32 = arith.constant 0 : i32
    return %arg0, %arg1 : i32, i32
  }
}

</mosaic_0001>

<llo_original>
// kernel: tpu_custom_call.1
$region0: #{tpu_custom_call.1}
  #allocation0 [shape = 'u32[]', space=smem, size = 0x4, offset = 0x4, fixed_abs, tag = 'smem constant byte address 0x4 - core index']
  #allocation1 [shape = 'u32[144,128]{1,0:T(1,128)}', space=vmem, size = 0x12000, scoped, tag = 'internal scratch']
  #allocation2 [shape = 'f32[256,128]{1,0:T(8,128)}', space=vmem, size = 0x20000, scoped, tag = 'scratch operand']
  %s0 = inlined_call_operand.hbm [shape: bf16[512,128], index: 0, kind: input, shape index: {}]
  %s1 = inlined_call_operand.hbm [shape: bf16[128,128], index: 1, kind: input, shape index: {}]
  %s2 = inlined_call_operand.hbm [shape: f32[1,128], index: 2, kind: input, shape index: {}]
  %s3 = inlined_call_operand.hbm [shape: f32[1,128], index: 3, kind: input, shape index: {}]
  %s4 = inlined_call_operand.hbm [shape: bf16[512,128], index: 4, kind: output, shape index: {}]
  %s5 = sld [smem:[#allocation0]]
  $region73: #{tpu_custom_call.1} parent=0
    _
  %s7 = ssub.s32 1, %s5
  %s8 = scalar_select 0, %s7, %s5
  $region1: #{tpu_custom_call.1} parent=0
    #allocation3 [shape = 'u8[131072]{0}', space=vmem, size = 0x20000, scoped, tag = 'input window, operand 0']
    #allocation4 [shape = 's32[2]{0}', space=sflag, size = 0x8, scoped, tag = 'scoped memory for tpu_custom_call.1']
    #allocation5 [shape = 's32[2]{0}', space=sflag, size = 0x8, scoped, tag = 'scoped memory for tpu_custom_call.1']
    #allocation6 [shape = 'u8[32768]{0}', space=vmem, size = 0x8000, scoped, tag = 'input window, operand 1, single buffered']
    #allocation7 [shape = 's32[1]{0}', space=sflag, size = 0x4, scoped, tag = 'scoped memory for tpu_custom_call.1']
    #allocation8 [shape = 'u8[512]{0}', space=vmem, size = 0x400, scoped, tag = 'input window, operand 2, single buffered']
    #allocation9 [shape = 'u8[512]{0}', space=vmem, size = 0x400, scoped, tag = 'input window, operand 3, single buffered']
    #allocation10 [shape = 's32[1]{0}', space=sflag, size = 0x4, scoped, tag = 'scoped memory for tpu_custom_call.1']
    #allocation11 [shape = 'u8[131072]{0}', space=vmem, size = 0x20000, scoped, tag = 'output window, operand 0']
    %9 = vsyncpa [#allocation4], 0
    %s10 = scalar_lea.sflag [#allocation4], 1
    %11 = vsyncpa %s10, 0
    %12 = vsyncpa [#allocation7], 0
    %13 = vsyncpa [#allocation10], 0
    %14 = vsyncpa [#allocation5], 0
    %s15 = scalar_lea.sflag [#allocation5], 1
    %16 = vsyncpa %s15, 0
    loop: start=0, step=1, limit=4
    $region2: #{tpu_custom_call.1} parent=1 // loop_pre_header
      _
    $region3: #{tpu_custom_call.1} parent=1 // loop_header
      %s18 = sphi 0, %s22
      %p19 = scmp.ge.s32.totalorder %s18, 4
      %s25 = sphi 0, %s44
      %s26 = sphi 0, %s40
      %s27 = sphi 0, %s36
      %s28 = sphi 0, %s25
      %s29 = sphi 0, %s26
      %s30 = sphi 0, %s27
      %s31 = sphi 0, %s28
      %s32 = sphi 0, %s29
      %s33 = sphi 0, %s30
      %s49 = sphi 0, %s51
      %s52 = sphi 0, %s49
      %s53 = sphi 0, %s52
      %s69 = sphi 0, %s53
      %s77 = sphi 0, %s79
      %s80 = sphi 0, %s77
      %s81 = sphi 0, %s80
      %s97 = sphi 0, %s81
      %s103 = sphi 0, %s105
      %s106 = sphi 0, %s103
      %s107 = sphi 0, %s106
      %s123 = sphi 0, %s107
      %s129 = sphi 0, %s131
      %s132 = sphi 0, %s129
      %s133 = sphi 0, %s132
      %s149 = sphi 0, %s133
      %s157 = sphi 0, %s159
      %s160 = sphi 0, %s157
      %s161 = sphi 0, %s160
      %s177 = sphi 0, %s161
    $region4: #{tpu_custom_call.1} parent=1 // loop_header_branch
      %21 = sbr.rel (%p19) target = $region8
    $region5: #{tpu_custom_call.1} parent=1 // loop_body
      %s23 = ssub.s32 %s18, 1
      %s24 = ssub.s32 %s18, 2
      %s34 = sadd.s32 1, %s27
      %p35 = scmp.ge.s32.totalorder %s34, 1
      %s36 = scalar_select %p35, 0, %s34
      %s37 = sadd.s32 1, %s26
      %s38 = scalar_select %p35, %s37, %s26
      %p39 = scmp.ge.s32.totalorder %s38, 1
      %s40 = scalar_select %p39, 0, %s38
      %s41 = sadd.s32 1, %s25
      %s42 = scalar_select %p39, %s41, %s25
      %p43 = scmp.ge.s32.totalorder %s42, 2
      %s44 = scalar_select %p43, 0, %s42
      %s45 = ssub.s32 %s25, %s44
      %s46 = ssub.s32 %s27, %s36
      %s47 = sor.u32 %s45, %s46
      %p48 = scmp.eq.s32.totalorder %s47, 0
      %s50 = sadd.s32 %s49, 1
      %s51 = scalar_select %p48, %s49, %s50
      %p54 = pneg %p48
      %p55 = scmp.eq.s32.totalorder %s18, 1
      %p56 = por %p54, %p55
      %p57 = scmp.ne.s32.totalorder %s49, %s52
      %p58 = scmp.eq.s32.totalorder %s18, 0
      %p59 = por %p57, %p58
      %p60 = scmp.ne.s32.totalorder %s49, %s52
      %p61 = scmp.eq.s32.totalorder %s23, 1
      %p62 = por %p60, %p61
      %p63 = scmp.ne.s32.totalorder %s52, %s53
      %p64 = scmp.eq.s32.totalorder %s23, 0
      %p65 = por %p63, %p64
      %p66 = scmp.ne.s32.totalorder %s52, %s53
      %p67 = scmp.eq.s32.totalorder %s24, 1
      %p68 = por %p66, %p67
      %p70 = scmp.ne.s32.totalorder %s53, %s69
      %p71 = scmp.eq.s32.totalorder %s24, 0
      %p72 = por %p70, %p71
      %s73 = ssub.s32 %s27, %s36
      %s74 = ssub.s32 %s26, %s40
      %s75 = sor.u32 %s73, %s74
      %p76 = scmp.eq.s32.totalorder %s75, 0
      %s78 = sadd.s32 %s77, 1
      %s79 = scalar_select %p76, %s77, %s78
      %p82 = pneg %p76
      %p83 = scmp.eq.s32.totalorder %s18, 1
      %p84 = por %p82, %p83
      %p85 = scmp.ne.s32.totalorder %s77, %s80
      %p86 = scmp.eq.s32.totalorder %s18, 0
      %p87 = por %p85, %p86
      %p88 = scmp.ne.s32.totalorder %s77, %s80
      %p89 = scmp.eq.s32.totalorder %s23, 1
      %p90 = por %p88, %p89
      %p91 = scmp.ne.s32.totalorder %s80, %s81
      %p92 = scmp.eq.s32.totalorder %s23, 0
      %p93 = por %p91, %p92
      %p94 = scmp.ne.s32.totalorder %s80, %s81
      %p95 = scmp.eq.s32.totalorder %s24, 1
      %p96 = por %p94, %p95
      %p98 = scmp.ne.s32.totalorder %s81, %s97
      %p99 = scmp.eq.s32.totalorder %s24, 0
      %p100 = por %p98, %p99
      %s101 = ssub.s32 %s26, %s40
      %p102 = scmp.eq.s32.totalorder %s101, 0
      %s104 = sadd.s32 %s103, 1
      %s105 = scalar_select %p102, %s103, %s104
      %p108 = pneg %p102
      %p109 = scmp.eq.s32.totalorder %s18, 1
      %p110 = por %p108, %p109
      %p111 = scmp.ne.s32.totalorder %s103, %s106
      %p112 = scmp.eq.s32.totalorder %s18, 0
      %p113 = por %p111, %p112
      %p114 = scmp.ne.s32.totalorder %s103, %s106
      %p115 = scmp.eq.s32.totalorder %s23, 1
      %p116 = por %p114, %p115
      %p117 = scmp.ne.s32.totalorder %s106, %s107
      %p118 = scmp.eq.s32.totalorder %s23, 0
      %p119 = por %p117, %p118
      %p120 = scmp.ne.s32.totalorder %s106, %s107
      %p121 = scmp.eq.s32.totalorder %s24, 1
      %p122 = por %p120, %p121
      %p124 = scmp.ne.s32.totalorder %s107, %s123
      %p125 = scmp.eq.s32.totalorder %s24, 0
      %p126 = por %p124, %p125
      %s127 = ssub.s32 %s26, %s40
      %p128 = scmp.eq.s32.totalorder %s127, 0
      %s130 = sadd.s32 %s129, 1
      %s131 = scalar_select %p128, %s129, %s130
      %p134 = pneg %p128
      %p135 = scmp.eq.s32.totalorder %s18, 1
      %p136 = por %p134, %p135
      %p137 = scmp.ne.s32.totalorder %s129, %s132
      %p138 = scmp.eq.s32.totalorder %s18, 0
      %p139 = por %p137, %p138
      %p140 = scmp.ne.s32.totalorder %s129, %s132
      %p141 = scmp.eq.s32.totalorder %s23, 1
      %p142 = por %p140, %p141
      %p143 = scmp.ne.s32.totalorder %s132, %s133
      %p144 = scmp.eq.s32.totalorder %s23, 0
      %p145 = por %p143, %p144
      %p146 = scmp.ne.s32.totalorder %s132, %s133
      %p147 = scmp.eq.s32.totalorder %s24, 1
      %p148 = por %p146, %p147
      %p150 = scmp.ne.s32.totalorder %s133, %s149
      %p151 = scmp.eq.s32.totalorder %s24, 0
      %p152 = por %p150, %p151
      %s153 = ssub.s32 %s25, %s44
      %s154 = ssub.s32 %s26, %s40
      %s155 = sor.u32 %s153, %s154
      %p156 = scmp.eq.s32.totalorder %s155, 0
      %s158 = sadd.s32 %s157, 1
      %s159 = scalar_select %p156, %s157, %s158
      %p162 = pneg %p156
      %p163 = scmp.eq.s32.totalorder %s18, 1
      %p164 = por %p162, %p163
      %p165 = scmp.ne.s32.totalorder %s157, %s160
      %p166 = scmp.eq.s32.totalorder %s18, 0
      %p167 = por %p165, %p166
      %p168 = scmp.ne.s32.totalorder %s157, %s160
      %p169 = scmp.eq.s32.totalorder %s23, 1
      %p170 = por %p168, %p169
      %p171 = scmp.ne.s32.totalorder %s160, %s161
      %p172 = scmp.eq.s32.totalorder %s23, 0
      %p173 = por %p171, %p172
      %p174 = scmp.ne.s32.totalorder %s160, %s161
      %p175 = scmp.eq.s32.totalorder %s24, 1
      %p176 = por %p174, %p175
      %p178 = scmp.ne.s32.totalorder %s161, %s177
      %p179 = scmp.eq.s32.totalorder %s24, 0
      %p180 = por %p178, %p179
      %p181 = scmp.le.s32.totalorder 1, %s18
      %p182 = scmp.lt.s32.totalorder %s18, 3
      %p183 = pnand %p181, %p182
      %p184 = pneg %p183
      // Predicated region
      $region9: #{tpu_custom_call.1} parent=5 // pred_check
        _
      $region10: #{tpu_custom_call.1} parent=5 // pred_check_branch
        %186 = sbr.rel (%p183) target = $region12
      $region11: #{tpu_custom_call.1} parent=5 // pred_region
        %s187 = ssub.s32 %s18, 1
        // Predicated region
        $region13: #{tpu_custom_call.1} parent=11 // pred_check
          %p188 = pneg %p93
        $region14: #{tpu_custom_call.1} parent=11 // pred_check_branch
          %190 = sbr.rel (%p188) target = $region16
        $region15: #{tpu_custom_call.1} parent=11 // pred_region
          %s191 = smul.u32 16, %s30
          %s193 = ssub.s32 1024, 1024
          %194 = vsyncadd [#allocation7], %s193
          %s195 = sadd.s32 %s29, %s191
          %s196 = smul.addr %s195, 64
          %s197 = scalar_lea.hbm %s1, %s196
          %s198 = sshll.u32 [#allocation6], 4
          %s199 = int_to_ptr.vmem [resolvable:$true] %s198
          %204 = dma.hbm_to_vmem [thread:$0]  %s197, 1024, %s199, [#allocation7], 64, 64, 4
        $region16: #{tpu_custom_call.1} parent=11 // pred_fallthru
          _
        // Predicated region
        $region17: #{tpu_custom_call.1} parent=11 // pred_check
          %p205 = pneg %p119
        $region18: #{tpu_custom_call.1} parent=11 // pred_check_branch
          %207 = sbr.rel (%p205) target = $region20
        $region19: #{tpu_custom_call.1} parent=11 // pred_region
          %s209 = ssub.s32 16, 16
          %210 = vsyncadd [#allocation7], %s209
          %s211 = smul.addr %s29, 16
          %s212 = scalar_lea.hbm %s2, %s211
          %s214 = sshll.u32 [#allocation8], 4
          %s215 = int_to_ptr.vmem [resolvable:$true] %s214
          %217 = dma.hbm_to_vmem [thread:$0]  %s212, 16, %s215, [#allocation7]
        $region20: #{tpu_custom_call.1} parent=11 // pred_fallthru
          _
        // Predicated region
        $region21: #{tpu_custom_call.1} parent=11 // pred_check
          %p218 = pneg %p145
        $region22: #{tpu_custom_call.1} parent=11 // pred_check_branch
          %220 = sbr.rel (%p218) target = $region24
        $region23: #{tpu_custom_call.1} parent=11 // pred_region
          %s222 = ssub.s32 16, 16
          %223 = vsyncadd [#allocation10], %s222
          %s224 = smul.addr %s29, 16
          %s225 = scalar_lea.hbm %s3, %s224
          %s227 = sshll.u32 [#allocation9], 4
          %s228 = int_to_ptr.vmem [resolvable:$true] %s227
          %230 = dma.hbm_to_vmem [thread:$0]  %s225, 16, %s228, [#allocation10]
        $region24: #{tpu_custom_call.1} parent=11 // pred_fallthru
          _
      $region12: #{tpu_custom_call.1} parent=5 // pred_fallthru
        _
      %p231 = scmp.lt.s32.totalorder %s18, 2
      // Predicated region
      $region25: #{tpu_custom_call.1} parent=5 // pred_check
        %p232 = pneg %p231
      $region26: #{tpu_custom_call.1} parent=5 // pred_check_branch
        %234 = sbr.rel (%p232) target = $region28
      $region27: #{tpu_custom_call.1} parent=5 // pred_region
        // Predicated region
        $region29: #{tpu_custom_call.1} parent=27 // pred_check
          %p235 = pneg %p59
        $region30: #{tpu_custom_call.1} parent=27 // pred_check_branch
          %237 = sbr.rel (%p235) target = $region32
        $region31: #{tpu_custom_call.1} parent=27 // pred_region
          %s238 = sand.u32 %s49, 1
          %s239 = scalar_lea.sflag [#allocation4], %s238
          %s240 = sand.u32 %s49, 1
          %s241 = smul.addr %s240, 128
          %s242 = scalar_lea.vmem [#allocation3], %s241
          %s243 = smul.u32 32, %s25
          %s245 = ssub.s32 2048, 2048
          %246 = vsyncadd %s239, %s245
          %s247 = sadd.s32 %s27, %s243
          %s248 = smul.addr %s247, 64
          %s249 = scalar_lea.hbm %s0, %s248
          %s250 = sshll.u32 %s242, 4
          %s251 = int_to_ptr.vmem [resolvable:$true] %s250
          %256 = dma.hbm_to_vmem [thread:$0]  %s249, 2048, %s251, %s239, 64, 64, 4
        $region32: #{tpu_custom_call.1} parent=27 // pred_fallthru
          _
      $region28: #{tpu_custom_call.1} parent=5 // pred_fallthru
        _
      %p257 = scmp.le.s32.totalorder 1, %s18
      %p258 = scmp.lt.s32.totalorder %s18, 3
      %p259 = pnand %p257, %p258
      %p260 = pneg %p259
      // Predicated region
      $region33: #{tpu_custom_call.1} parent=5 // pred_check
        _
      $region34: #{tpu_custom_call.1} parent=5 // pred_check_branch
        %262 = sbr.rel (%p259) target = $region36
      $region35: #{tpu_custom_call.1} parent=5 // pred_region
        %s263 = ssub.s32 %s18, 1
        %s264 = sand.u32 %s52, 1
        %s265 = scalar_lea.sflag [#allocation4], %s264
        %s266 = sand.u32 %s52, 1
        %s267 = smul.addr %s266, 128
        %s268 = scalar_lea.vmem [#allocation3], %s267
        // Predicated region
        $region37: #{tpu_custom_call.1} parent=35 // pred_check
          %p269 = pneg %p65
        $region38: #{tpu_custom_call.1} parent=35 // pred_check_branch
          %271 = sbr.rel (%p269) target = $region40
        $region39: #{tpu_custom_call.1} parent=35 // pred_region
          %272 = dma.done %s265, 2048
        $region40: #{tpu_custom_call.1} parent=35 // pred_fallthru
          _
        // Predicated region
        $region41: #{tpu_custom_call.1} parent=35 // pred_check
          %p273 = pneg %p93
        $region42: #{tpu_custom_call.1} parent=35 // pred_check_branch
          %275 = sbr.rel (%p273) target = $region44
        $region43: #{tpu_custom_call.1} parent=35 // pred_region
          %276 = dma.done [#allocation7], 1024
        $region44: #{tpu_custom_call.1} parent=35 // pred_fallthru
          _
        // Predicated region
        $region45: #{tpu_custom_call.1} parent=35 // pred_check
          %p277 = pneg %p119
        $region46: #{tpu_custom_call.1} parent=35 // pred_check_branch
          %279 = sbr.rel (%p277) target = $region48
        $region47: #{tpu_custom_call.1} parent=35 // pred_region
          %280 = dma.done [#allocation7], 16
        $region48: #{tpu_custom_call.1} parent=35 // pred_fallthru
          _
        // Predicated region
        $region49: #{tpu_custom_call.1} parent=35 // pred_check
          %p281 = pneg %p145
        $region50: #{tpu_custom_call.1} parent=35 // pred_check_branch
          %283 = sbr.rel (%p281) target = $region52
        $region51: #{tpu_custom_call.1} parent=35 // pred_region
          %284 = dma.done [#allocation10], 16
        $region52: #{tpu_custom_call.1} parent=35 // pred_fallthru
          _
        %s285 = sand.u32 %s52, 1
        %s286 = scalar_lea.sflag [#allocation4], %s285
        %s287 = sand.u32 %s52, 1
        %s288 = smul.addr %s287, 128
        %s289 = scalar_lea.vmem [#allocation3], %s288
        %p290 = pneg %p65
        %p291 = pneg %p62
        %p292 = pneg %p93
        %p293 = pneg %p90
        %p294 = pneg %p119
        %p295 = pneg %p116
        %p296 = pneg %p145
        %p297 = pneg %p142
        %p298 = pneg %p173
        %p299 = pneg %p170
        %s300 = sand.u32 %s160, 1
        %s301 = scalar_lea.sflag [#allocation5], %s300
        %s302 = sand.u32 %s160, 1
        %s303 = smul.addr %s302, 128
        %s304 = scalar_lea.vmem [#allocation11], %s303
        %s305 = smul.u32 32, %s28
        %s306 = smul.u32 16, %s30
        %s307 = smul.u32 32, %s28
        %p309 = scmp.eq.s32.totalorder %s30, 0
        // Predicated region
        $region53: #{tpu_custom_call.1} parent=35 // pred_check
          %p310 = pneg %p309
        $region54: #{tpu_custom_call.1} parent=35 // pred_check_branch
          %312 = sbr.rel (%p310) target = $region56
        $region55: #{tpu_custom_call.1} parent=35 // pred_region
          %313 = vst [vmem:[#allocation2] sm:$0xff] 0.0
          %314 = vst [vmem:[#allocation2 + $0x8] sm:$0xff] 0.0
          %315 = vst [vmem:[#allocation2 + $0x10] sm:$0xff] 0.0
          %316 = vst [vmem:[#allocation2 + $0x18] sm:$0xff] 0.0
          %317 = vst [vmem:[#allocation2 + $0x20] sm:$0xff] 0.0
          %318 = vst [vmem:[#allocation2 + $0x28] sm:$0xff] 0.0
          %319 = vst [vmem:[#allocation2 + $0x30] sm:$0xff] 0.0
          %320 = vst [vmem:[#allocation2 + $0x38] sm:$0xff] 0.0
          %321 = vst [vmem:[#allocation2 + $0x40] sm:$0xff] 0.0
          %322 = vst [vmem:[#allocation2 + $0x48] sm:$0xff] 0.0
          %323 = vst [vmem:[#allocation2 + $0x50] sm:$0xff] 0.0
          %324 = vst [vmem:[#allocation2 + $0x58] sm:$0xff] 0.0
          %325 = vst [vmem:[#allocation2 + $0x60] sm:$0xff] 0.0
          %326 = vst [vmem:[#allocation2 + $0x68] sm:$0xff] 0.0
          %327 = vst [vmem:[#allocation2 + $0x70] sm:$0xff] 0.0
          %328 = vst [vmem:[#allocation2 + $0x78] sm:$0xff] 0.0
          %329 = vst [vmem:[#allocation2 + $0x80] sm:$0xff] 0.0
          %330 = vst [vmem:[#allocation2 + $0x88] sm:$0xff] 0.0
          %331 = vst [vmem:[#allocation2 + $0x90] sm:$0xff] 0.0
          %332 = vst [vmem:[#allocation2 + $0x98] sm:$0xff] 0.0
          %333 = vst [vmem:[#allocation2 + $0xa0] sm:$0xff] 0.0
          %334 = vst [vmem:[#allocation2 + $0xa8] sm:$0xff] 0.0
          %335 = vst [vmem:[#allocation2 + $0xb0] sm:$0xff] 0.0
          %336 = vst [vmem:[#allocation2 + $0xb8] sm:$0xff] 0.0
          %337 = vst [vmem:[#allocation2 + $0xc0] sm:$0xff] 0.0
          %338 = vst [vmem:[#allocation2 + $0xc8] sm:$0xff] 0.0
          %339 = vst [vmem:[#allocation2 + $0xd0] sm:$0xff] 0.0
          %340 = vst [vmem:[#allocation2 + $0xd8] sm:$0xff] 0.0
          %341 = vst [vmem:[#allocation2 + $0xe0] sm:$0xff] 0.0
          %342 = vst [vmem:[#allocation2 + $0xe8] sm:$0xff] 0.0
          %343 = vst [vmem:[#allocation2 + $0xf0] sm:$0xff] 0.0
          %344 = vst [vmem:[#allocation2 + $0xf8] sm:$0xff] 0.0
        $region56: #{tpu_custom_call.1} parent=35 // pred_fallthru
          _
        %v345 = vld [vmem:[#allocation2] sm:$0xff]
        %v346 = vld [vmem:[#allocation2 + $0x8] sm:$0xff]
        %v347 = vld [vmem:[#allocation2 + $0x10] sm:$0xff]
        %v348 = vld [vmem:[#allocation2 + $0x18] sm:$0xff]
        %v349 = vld [vmem:[#allocation2 + $0x20] sm:$0xff]
        %v350 = vld [vmem:[#allocation2 + $0x28] sm:$0xff]
        %v351 = vld [vmem:[#allocation2 + $0x30] sm:$0xff]
        %v352 = vld [vmem:[#allocation2 + $0x38] sm:$0xff]
        %v353 = vld [vmem:[#allocation2 + $0x40] sm:$0xff]
        %v354 = vld [vmem:[#allocation2 + $0x48] sm:$0xff]
        %v355 = vld [vmem:[#allocation2 + $0x50] sm:$0xff]
        %v356 = vld [vmem:[#allocation2 + $0x58] sm:$0xff]
        %v357 = vld [vmem:[#allocation2 + $0x60] sm:$0xff]
        %v358 = vld [vmem:[#allocation2 + $0x68] sm:$0xff]
        %v359 = vld [vmem:[#allocation2 + $0x70] sm:$0xff]
        %v360 = vld [vmem:[#allocation2 + $0x78] sm:$0xff]
        %v361 = vld [vmem:[#allocation2 + $0x80] sm:$0xff]
        %v362 = vld [vmem:[#allocation2 + $0x88] sm:$0xff]
        %v363 = vld [vmem:[#allocation2 + $0x90] sm:$0xff]
        %v364 = vld [vmem:[#allocation2 + $0x98] sm:$0xff]
        %v365 = vld [vmem:[#allocation2 + $0xa0] sm:$0xff]
        %v366 = vld [vmem:[#allocation2 + $0xa8] sm:$0xff]
        %v367 = vld [vmem:[#allocation2 + $0xb0] sm:$0xff]
        %v368 = vld [vmem:[#allocation2 + $0xb8] sm:$0xff]
        %v369 = vld [vmem:[#allocation2 + $0xc0] sm:$0xff]
        %v370 = vld [vmem:[#allocation2 + $0xc8] sm:$0xff]
        %v371 = vld [vmem:[#allocation2 + $0xd0] sm:$0xff]
        %v372 = vld [vmem:[#allocation2 + $0xd8] sm:$0xff]
        %v373 = vld [vmem:[#allocation2 + $0xe0] sm:$0xff]
        %v374 = vld [vmem:[#allocation2 + $0xe8] sm:$0xff]
        %v375 = vld [vmem:[#allocation2 + $0xf0] sm:$0xff]
        %v376 = vld [vmem:[#allocation2 + $0xf8] sm:$0xff]
        %v377 = vld [vmem:[%s268] sm:$0xf]
        %v378 = vld [vmem:[%s268 + $0x4] sm:$0xf]
        %v379 = vld [vmem:[%s268 + $0x8] sm:$0xf]
        %v380 = vld [vmem:[%s268 + $0xc] sm:$0xf]
        %v381 = vld [vmem:[%s268 + $0x10] sm:$0xf]
        %v382 = vld [vmem:[%s268 + $0x14] sm:$0xf]
        %v383 = vld [vmem:[%s268 + $0x18] sm:$0xf]
        %v384 = vld [vmem:[%s268 + $0x1c] sm:$0xf]
        %v385 = vld [vmem:[%s268 + $0x20] sm:$0xf]
        %v386 = vld [vmem:[%s268 + $0x24] sm:$0xf]
        %v387 = vld [vmem:[%s268 + $0x28] sm:$0xf]
        %v388 = vld [vmem:[%s268 + $0x2c] sm:$0xf]
        %v389 = vld [vmem:[%s268 + $0x30] sm:$0xf]
        %v390 = vld [vmem:[%s268 + $0x34] sm:$0xf]
        %v391 = vld [vmem:[%s268 + $0x38] sm:$0xf]
        %v392 = vld [vmem:[%s268 + $0x3c] sm:$0xf]
        %v393 = vld [vmem:[%s268 + $0x40] sm:$0xf]
        %v394 = vld [vmem:[%s268 + $0x44] sm:$0xf]
        %v395 = vld [vmem:[%s268 + $0x48] sm:$0xf]
        %v396 = vld [vmem:[%s268 + $0x4c] sm:$0xf]
        %v397 = vld [vmem:[%s268 + $0x50] sm:$0xf]
        %v398 = vld [vmem:[%s268 + $0x54] sm:$0xf]
        %v399 = vld [vmem:[%s268 + $0x58] sm:$0xf]
        %v400 = vld [vmem:[%s268 + $0x5c] sm:$0xf]
        %v401 = vld [vmem:[%s268 + $0x60] sm:$0xf]
        %v402 = vld [vmem:[%s268 + $0x64] sm:$0xf]
        %v403 = vld [vmem:[%s268 + $0x68] sm:$0xf]
        %v404 = vld [vmem:[%s268 + $0x6c] sm:$0xf]
        %v405 = vld [vmem:[%s268 + $0x70] sm:$0xf]
        %v406 = vld [vmem:[%s268 + $0x74] sm:$0xf]
        %v407 = vld [vmem:[%s268 + $0x78] sm:$0xf]
        %v408 = vld [vmem:[%s268 + $0x7c] sm:$0xf]
        %v409 = vld [vmem:[#allocation6] sm:$0xf]
        %v410 = vld [vmem:[#allocation6 + $0x4] sm:$0xf]
        %v411 = vld [vmem:[#allocation6 + $0x8] sm:$0xf]
        %v412 = vld [vmem:[#allocation6 + $0xc] sm:$0xf]
        %v413 = vld [vmem:[#allocation6 + $0x10] sm:$0xf]
        %v414 = vld [vmem:[#allocation6 + $0x14] sm:$0xf]
        %v415 = vld [vmem:[#allocation6 + $0x18] sm:$0xf]
        %v416 = vld [vmem:[#allocation6 + $0x1c] sm:$0xf]
        %v417 = vld [vmem:[#allocation6 + $0x20] sm:$0xf]
        %v418 = vld [vmem:[#allocation6 + $0x24] sm:$0xf]
        %v419 = vld [vmem:[#allocation6 + $0x28] sm:$0xf]
        %v420 = vld [vmem:[#allocation6 + $0x2c] sm:$0xf]
        %v421 = vld [vmem:[#allocation6 + $0x30] sm:$0xf]
        %v422 = vld [vmem:[#allocation6 + $0x34] sm:$0xf]
        %v423 = vld [vmem:[#allocation6 + $0x38] sm:$0xf]
        %v424 = vld [vmem:[#allocation6 + $0x3c] sm:$0xf]
        %v457 = vunpack.c.l.b16 %v377
        %v458 = vunpack.c.l.b16 %v378
        %v459 = vunpack.c.l.b16 %v379
        %v460 = vunpack.c.l.b16 %v380
        %v461 = vunpack.c.l.b16 %v381
        %v462 = vunpack.c.l.b16 %v382
        %v463 = vunpack.c.l.b16 %v383
        %v464 = vunpack.c.l.b16 %v384
        %v465 = vunpack.c.l.b16 %v385
        %v466 = vunpack.c.l.b16 %v386
        %v467 = vunpack.c.l.b16 %v387
        %v468 = vunpack.c.l.b16 %v388
        %v469 = vunpack.c.l.b16 %v389
        %v470 = vunpack.c.l.b16 %v390
        %v471 = vunpack.c.l.b16 %v391
        %v472 = vunpack.c.l.b16 %v392
        %v473 = vunpack.c.l.b16 %v393
        %v474 = vunpack.c.l.b16 %v394
        %v475 = vunpack.c.l.b16 %v395
        %v476 = vunpack.c.l.b16 %v396
        %v477 = vunpack.c.l.b16 %v397
        %v478 = vunpack.c.l.b16 %v398
        %v479 = vunpack.c.l.b16 %v399
        %v480 = vunpack.c.l.b16 %v400
        %v481 = vunpack.c.l.b16 %v401
        %v482 = vunpack.c.l.b16 %v402
        %v483 = vunpack.c.l.b16 %v403
        %v484 = vunpack.c.l.b16 %v404
        %v485 = vunpack.c.l.b16 %v405
        %v486 = vunpack.c.l.b16 %v406
        %v487 = vunpack.c.l.b16 %v407
        %v488 = vunpack.c.l.b16 %v408
        %v489 = vpack.c.b16 %v458, %v457
        %v490 = vpack.c.b16 %v460, %v459
        %v491 = vpack.c.b16 %v462, %v461
        %v492 = vpack.c.b16 %v464, %v463
        %v493 = vpack.c.b16 %v466, %v465
        %v494 = vpack.c.b16 %v468, %v467
        %v495 = vpack.c.b16 %v470, %v469
        %v496 = vpack.c.b16 %v472, %v471
        %v497 = vpack.c.b16 %v474, %v473
        %v498 = vpack.c.b16 %v476, %v475
        %v499 = vpack.c.b16 %v478, %v477
        %v500 = vpack.c.b16 %v480, %v479
        %v501 = vpack.c.b16 %v482, %v481
        %v502 = vpack.c.b16 %v484, %v483
        %v503 = vpack.c.b16 %v486, %v485
        %v504 = vpack.c.b16 %v488, %v487
        %v537 = vunpack.c.l.b16 %v409
        %v538 = vunpack.c.l.b16 %v410
        %v539 = vunpack.c.l.b16 %v411
        %v540 = vunpack.c.l.b16 %v412
        %v541 = vunpack.c.l.b16 %v413
        %v542 = vunpack.c.l.b16 %v414
        %v543 = vunpack.c.l.b16 %v415
        %v544 = vunpack.c.l.b16 %v416
        %v545 = vunpack.c.l.b16 %v417
        %v546 = vunpack.c.l.b16 %v418
        %v547 = vunpack.c.l.b16 %v419
        %v548 = vunpack.c.l.b16 %v420
        %v549 = vunpack.c.l.b16 %v421
        %v550 = vunpack.c.l.b16 %v422
        %v551 = vunpack.c.l.b16 %v423
        %v552 = vunpack.c.l.b16 %v424
        %v553 = vpack.c.b16 %v538, %v537
        %v554 = vpack.c.b16 %v540, %v539
        %v555 = vpack.c.b16 %v542, %v541
        %v556 = vpack.c.b16 %v544, %v543
        %v557 = vpack.c.b16 %v546, %v545
        %v558 = vpack.c.b16 %v548, %v547
        %v559 = vpack.c.b16 %v550, %v549
        %v560 = vpack.c.b16 %v552, %v551
        %569 = vmatprep.subr.bf16.mxu0 0
        %570 = vmatpush1.bf16.msra.mxu0 %v553
        %571 = vmatprep.subr.bf16.mxu0 0
        %572 = vmatpush1.bf16.msra.mxu0 %v554
        %573 = vmatprep.subr.bf16.mxu0 0
        %574 = vmatpush1.bf16.msra.mxu0 %v555
        %575 = vmatprep.subr.bf16.mxu0 0
        %576 = vmatpush1.bf16.msra.mxu0 %v556
        %577 = vmatprep.subr.bf16.mxu0 0
        %578 = vmatpush1.bf16.msra.mxu0 %v557
        %579 = vmatprep.subr.bf16.mxu0 0
        %580 = vmatpush1.bf16.msra.mxu0 %v558
        %581 = vmatprep.subr.bf16.mxu0 0
        %582 = vmatpush1.bf16.msra.mxu0 %v559
        %583 = vmatprep.subr.bf16.mxu0 0
        %584 = vmatpush1.bf16.msra.mxu0 %v560
        %585 = vmatprep.subr.bf16.mxu0 0
        %586 = vmatpush1.bf16.msra.mxu0 0
        %587 = vmatprep.subr.bf16.mxu0 0
        %588 = vmatpush1.bf16.msra.mxu0 0
        %589 = vmatprep.subr.bf16.mxu0 0
        %590 = vmatpush1.bf16.msra.mxu0 0
        %591 = vmatprep.subr.bf16.mxu0 0
        %592 = vmatpush1.bf16.msra.mxu0 0
        %593 = vmatprep.subr.bf16.mxu0 0
        %594 = vmatpush1.bf16.msra.mxu0 0
        %595 = vmatprep.subr.bf16.mxu0 0
        %596 = vmatpush1.bf16.msra.mxu0 0
        %597 = vmatprep.subr.bf16.mxu0 0
        %598 = vmatpush1.bf16.msra.mxu0 0
        %599 = vmatprep.subr.bf16.mxu0 0
        %600 = vmatpush1.bf16.msra.mxu0 0
        %601 = vmatprep.mubr.bf16.mxu0 0
        %602 = vmatmul.mubr.bf16.gmra.mrb[0].mxu0 %v489
        %v603 = vpop.f32.mrb[0].mxu0
        %v604 = vadd.f32 0.0, %v603
        %v605 = vpop.f32.mrb[0].mxu0
        %v606 = vpop.f32.mrb[0].mxu0
        %v607 = vadd.f32 0.0, %v606
        %v608 = vpop.f32.mrb[0].mxu0
        %609 = vmatprep.mubr.bf16.mxu0 0
        %610 = vmatmul.mubr.bf16.gmra.mrb[0].mxu0 %v490
        %v611 = vpop.f32.mrb[0].mxu0
        %v612 = vadd.f32 0.0, %v611
        %v613 = vpop.f32.mrb[0].mxu0
        %v614 = vpop.f32.mrb[0].mxu0
        %v615 = vadd.f32 0.0, %v614
        %v616 = vpop.f32.mrb[0].mxu0
        %617 = vmatprep.mubr.bf16.mxu0 0
        %618 = vmatmul.mubr.bf16.gmra.mrb[0].mxu0 %v491
        %v619 = vpop.f32.mrb[0].mxu0
        %v620 = vadd.f32 0.0, %v619
        %v621 = vpop.f32.mrb[0].mxu0
        %v622 = vpop.f32.mrb[0].mxu0
        %v623 = vadd.f32 0.0, %v622
        %v624 = vpop.f32.mrb[0].mxu0
        %625 = vmatprep.mubr.bf16.mxu0 0
        %626 = vmatmul.mubr.bf16.gmra.mrb[0].mxu0 %v492
        %v627 = vpop.f32.mrb[0].mxu0
        %v628 = vadd.f32 0.0, %v627
        %v629 = vpop.f32.mrb[0].mxu0
        %v630 = vpop.f32.mrb[0].mxu0
        %v631 = vadd.f32 0.0, %v630
        %v632 = vpop.f32.mrb[0].mxu0
        %633 = vmatprep.mubr.bf16.mxu0 0
        %634 = vmatmul.mubr.bf16.gmra.mrb[0].mxu0 %v493
        %v635 = vpop.f32.mrb[0].mxu0
        %v636 = vadd.f32 0.0, %v635
        %v637 = vpop.f32.mrb[0].mxu0
        %v638 = vpop.f32.mrb[0].mxu0
        %v639 = vadd.f32 0.0, %v638
        %v640 = vpop.f32.mrb[0].mxu0
        %641 = vmatprep.mubr.bf16.mxu0 0
        %642 = vmatmul.mubr.bf16.gmra.mrb[0].mxu0 %v494
        %v643 = vpop.f32.mrb[0].mxu0
        %v644 = vadd.f32 0.0, %v643
        %v645 = vpop.f32.mrb[0].mxu0
        %v646 = vpop.f32.mrb[0].mxu0
        %v647 = vadd.f32 0.0, %v646
        %v648 = vpop.f32.mrb[0].mxu0
        %649 = vmatprep.mubr.bf16.mxu0 0
        %650 = vmatmul.mubr.bf16.gmra.mrb[0].mxu0 %v495
        %v651 = vpop.f32.mrb[0].mxu0
        %v652 = vadd.f32 0.0, %v651
        %v653 = vpop.f32.mrb[0].mxu0
        %v654 = vpop.f32.mrb[0].mxu0
        %v655 = vadd.f32 0.0, %v654
        %v656 = vpop.f32.mrb[0].mxu0
        %657 = vmatprep.mubr.bf16.mxu0 0
        %658 = vmatmul.mubr.bf16.gmra.mrb[0].mxu0 %v496
        %v659 = vpop.f32.mrb[0].mxu0
        %v660 = vadd.f32 0.0, %v659
        %v661 = vpop.f32.mrb[0].mxu0
        %v662 = vpop.f32.mrb[0].mxu0
        %v663 = vadd.f32 0.0, %v662
        %v664 = vpop.f32.mrb[0].mxu0
        %665 = vmatprep.mubr.bf16.mxu0 0
        %666 = vmatmul.mubr.bf16.gmra.mrb[0].mxu0 %v497
        %v667 = vpop.f32.mrb[0].mxu0
        %v668 = vadd.f32 0.0, %v667
        %v669 = vpop.f32.mrb[0].mxu0
        %v670 = vpop.f32.mrb[0].mxu0
        %v671 = vadd.f32 0.0, %v670
        %v672 = vpop.f32.mrb[0].mxu0
        %673 = vmatprep.mubr.bf16.mxu0 0
        %674 = vmatmul.mubr.bf16.gmra.mrb[0].mxu0 %v498
        %v675 = vpop.f32.mrb[0].mxu0
        %v676 = vadd.f32 0.0, %v675
        %v677 = vpop.f32.mrb[0].mxu0
        %v678 = vpop.f32.mrb[0].mxu0
        %v679 = vadd.f32 0.0, %v678
        %v680 = vpop.f32.mrb[0].mxu0
        %681 = vmatprep.mubr.bf16.mxu0 0
        %682 = vmatmul.mubr.bf16.gmra.mrb[0].mxu0 %v499
        %v683 = vpop.f32.mrb[0].mxu0
        %v684 = vadd.f32 0.0, %v683
        %v685 = vpop.f32.mrb[0].mxu0
        %v686 = vpop.f32.mrb[0].mxu0
        %v687 = vadd.f32 0.0, %v686
        %v688 = vpop.f32.mrb[0].mxu0
        %689 = vmatprep.mubr.bf16.mxu0 0
        %690 = vmatmul.mubr.bf16.gmra.mrb[0].mxu0 %v500
        %v691 = vpop.f32.mrb[0].mxu0
        %v692 = vadd.f32 0.0, %v691
        %v693 = vpop.f32.mrb[0].mxu0
        %v694 = vpop.f32.mrb[0].mxu0
        %v695 = vadd.f32 0.0, %v694
        %v696 = vpop.f32.mrb[0].mxu0
        %697 = vmatprep.mubr.bf16.mxu0 0
        %698 = vmatmul.mubr.bf16.gmra.mrb[0].mxu0 %v501
        %v699 = vpop.f32.mrb[0].mxu0
        %v700 = vadd.f32 0.0, %v699
        %v701 = vpop.f32.mrb[0].mxu0
        %v702 = vpop.f32.mrb[0].mxu0
        %v703 = vadd.f32 0.0, %v702
        %v704 = vpop.f32.mrb[0].mxu0
        %705 = vmatprep.mubr.bf16.mxu0 0
        %706 = vmatmul.mubr.bf16.gmra.mrb[0].mxu0 %v502
        %v707 = vpop.f32.mrb[0].mxu0
        %v708 = vadd.f32 0.0, %v707
        %v709 = vpop.f32.mrb[0].mxu0
        %v710 = vpop.f32.mrb[0].mxu0
        %v711 = vadd.f32 0.0, %v710
        %v712 = vpop.f32.mrb[0].mxu0
        %713 = vmatprep.mubr.bf16.mxu0 0
        %714 = vmatmul.mubr.bf16.gmra.mrb[0].mxu0 %v503
        %v715 = vpop.f32.mrb[0].mxu0
        %v716 = vadd.f32 0.0, %v715
        %v717 = vpop.f32.mrb[0].mxu0
        %v718 = vpop.f32.mrb[0].mxu0
        %v719 = vadd.f32 0.0, %v718
        %v720 = vpop.f32.mrb[0].mxu0
        %721 = vmatprep.mubr.bf16.mxu0 0
        %722 = vmatmul.mubr.bf16.gmra.mrb[0].mxu0 %v504
        %v723 = vpop.f32.mrb[0].mxu0
        %v724 = vadd.f32 0.0, %v723
        %v725 = vpop.f32.mrb[0].mxu0
        %v726 = vpop.f32.mrb[0].mxu0
        %v727 = vadd.f32 0.0, %v726
        %v728 = vpop.f32.mrb[0].mxu0
        %729 = vdwg.mxu0
        %v730 = vadd.f32 %v345, %v604
        %v731 = vadd.f32 %v346, %v607
        %v732 = vadd.f32 %v347, %v612
        %v733 = vadd.f32 %v348, %v615
        %v734 = vadd.f32 %v349, %v620
        %v735 = vadd.f32 %v350, %v623
        %v736 = vadd.f32 %v351, %v628
        %v737 = vadd.f32 %v352, %v631
        %v738 = vadd.f32 %v353, %v636
        %v739 = vadd.f32 %v354, %v639
        %v740 = vadd.f32 %v355, %v644
        %v741 = vadd.f32 %v356, %v647
        %v742 = vadd.f32 %v357, %v652
        %v743 = vadd.f32 %v358, %v655
        %v744 = vadd.f32 %v359, %v660
        %v745 = vadd.f32 %v360, %v663
        %v746 = vadd.f32 %v361, %v668
        %v747 = vadd.f32 %v362, %v671
        %v748 = vadd.f32 %v363, %v676
        %v749 = vadd.f32 %v364, %v679
        %v750 = vadd.f32 %v365, %v684
        %v751 = vadd.f32 %v366, %v687
        %v752 = vadd.f32 %v367, %v692
        %v753 = vadd.f32 %v368, %v695
        %v754 = vadd.f32 %v369, %v700
        %v755 = vadd.f32 %v370, %v703
        %v756 = vadd.f32 %v371, %v708
        %v757 = vadd.f32 %v372, %v711
        %v758 = vadd.f32 %v373, %v716
        %v759 = vadd.f32 %v374, %v719
        %v760 = vadd.f32 %v375, %v724
        %v761 = vadd.f32 %v376, %v727
        %762 = vst [vmem:[#allocation2] sm:$0xff] %v730
        %763 = vst [vmem:[#allocation2 + $0x8] sm:$0xff] %v731
        %764 = vst [vmem:[#allocation2 + $0x10] sm:$0xff] %v732
        %765 = vst [vmem:[#allocation2 + $0x18] sm:$0xff] %v733
        %766 = vst [vmem:[#allocation2 + $0x20] sm:$0xff] %v734
        %767 = vst [vmem:[#allocation2 + $0x28] sm:$0xff] %v735
        %768 = vst [vmem:[#allocation2 + $0x30] sm:$0xff] %v736
        %769 = vst [vmem:[#allocation2 + $0x38] sm:$0xff] %v737
        %770 = vst [vmem:[#allocation2 + $0x40] sm:$0xff] %v738
        %771 = vst [vmem:[#allocation2 + $0x48] sm:$0xff] %v739
        %772 = vst [vmem:[#allocation2 + $0x50] sm:$0xff] %v740
        %773 = vst [vmem:[#allocation2 + $0x58] sm:$0xff] %v741
        %774 = vst [vmem:[#allocation2 + $0x60] sm:$0xff] %v742
        %775 = vst [vmem:[#allocation2 + $0x68] sm:$0xff] %v743
        %776 = vst [vmem:[#allocation2 + $0x70] sm:$0xff] %v744
        %777 = vst [vmem:[#allocation2 + $0x78] sm:$0xff] %v745
        %778 = vst [vmem:[#allocation2 + $0x80] sm:$0xff] %v746
        %779 = vst [vmem:[#allocation2 + $0x88] sm:$0xff] %v747
        %780 = vst [vmem:[#allocation2 + $0x90] sm:$0xff] %v748
        %781 = vst [vmem:[#allocation2 + $0x98] sm:$0xff] %v749
        %782 = vst [vmem:[#allocation2 + $0xa0] sm:$0xff] %v750
        %783 = vst [vmem:[#allocation2 + $0xa8] sm:$0xff] %v751
        %784 = vst [vmem:[#allocation2 + $0xb0] sm:$0xff] %v752
        %785 = vst [vmem:[#allocation2 + $0xb8] sm:$0xff] %v753
        %786 = vst [vmem:[#allocation2 + $0xc0] sm:$0xff] %v754
        %787 = vst [vmem:[#allocation2 + $0xc8] sm:$0xff] %v755
        %788 = vst [vmem:[#allocation2 + $0xd0] sm:$0xff] %v756
        %789 = vst [vmem:[#allocation2 + $0xd8] sm:$0xff] %v757
        %790 = vst [vmem:[#allocation2 + $0xe0] sm:$0xff] %v758
        %791 = vst [vmem:[#allocation2 + $0xe8] sm:$0xff] %v759
        %792 = vst [vmem:[#allocation2 + $0xf0] sm:$0xff] %v760
        %793 = vst [vmem:[#allocation2 + $0xf8] sm:$0xff] %v761
        // Predicated region
        $region57: #{tpu_custom_call.1} parent=35 // pred_check
          %p794 = pneg %p309
        $region58: #{tpu_custom_call.1} parent=35 // pred_check_branch
          %796 = sbr.rel (%p794) target = $region60
        $region59: #{tpu_custom_call.1} parent=35 // pred_region
          %v797 = vld [vmem:[#allocation2] sm:$0xff]
          %v798 = vld [vmem:[#allocation2 + $0x8] sm:$0xff]
          %v799 = vld [vmem:[#allocation2 + $0x10] sm:$0xff]
          %v800 = vld [vmem:[#allocation2 + $0x18] sm:$0xff]
          %v801 = vld [vmem:[#allocation2 + $0x20] sm:$0xff]
          %v802 = vld [vmem:[#allocation2 + $0x28] sm:$0xff]
          %v803 = vld [vmem:[#allocation2 + $0x30] sm:$0xff]
          %v804 = vld [vmem:[#allocation2 + $0x38] sm:$0xff]
          %v805 = vld [vmem:[#allocation2 + $0x40] sm:$0xff]
          %v806 = vld [vmem:[#allocation2 + $0x48] sm:$0xff]
          %v807 = vld [vmem:[#allocation2 + $0x50] sm:$0xff]
          %v808 = vld [vmem:[#allocation2 + $0x58] sm:$0xff]
          %v809 = vld [vmem:[#allocation2 + $0x60] sm:$0xff]
          %v810 = vld [vmem:[#allocation2 + $0x68] sm:$0xff]
          %v811 = vld [vmem:[#allocation2 + $0x70] sm:$0xff]
          %v812 = vld [vmem:[#allocation2 + $0x78] sm:$0xff]
          %v813 = vld [vmem:[#allocation2 + $0x80] sm:$0xff]
          %v814 = vld [vmem:[#allocation2 + $0x88] sm:$0xff]
          %v815 = vld [vmem:[#allocation2 + $0x90] sm:$0xff]
          %v816 = vld [vmem:[#allocation2 + $0x98] sm:$0xff]
          %v817 = vld [vmem:[#allocation2 + $0xa0] sm:$0xff]
          %v818 = vld [vmem:[#allocation2 + $0xa8] sm:$0xff]
          %v819 = vld [vmem:[#allocation2 + $0xb0] sm:$0xff]
          %v820 = vld [vmem:[#allocation2 + $0xb8] sm:$0xff]
          %v821 = vld [vmem:[#allocation2 + $0xc0] sm:$0xff]
          %v822 = vld [vmem:[#allocation2 + $0xc8] sm:$0xff]
          %v823 = vld [vmem:[#allocation2 + $0xd0] sm:$0xff]
          %v824 = vld [vmem:[#allocation2 + $0xd8] sm:$0xff]
          %v825 = vld [vmem:[#allocation2 + $0xe0] sm:$0xff]
          %v826 = vld [vmem:[#allocation2 + $0xe8] sm:$0xff]
          %v827 = vld [vmem:[#allocation2 + $0xf0] sm:$0xff]
          %v828 = vld [vmem:[#allocation2 + $0xf8] sm:$0xff]
          %v829 = vld [vmem:[#allocation8] sm:$0x1]
          %v831 = vlaneseq
          %v832 = vshrl.u32 %v831, 7
          %v833 = vsub.s32 0, %v832
          %v834 = vrot.slane %v829, %v833
          %v836 = vmul.f32 %v797, %v834
          %v837 = vmul.f32 %v798, %v834
          %v838 = vmul.f32 %v799, %v834
          %v839 = vmul.f32 %v800, %v834
          %v840 = vmul.f32 %v801, %v834
          %v841 = vmul.f32 %v802, %v834
          %v842 = vmul.f32 %v803, %v834
          %v843 = vmul.f32 %v804, %v834
          %v844 = vmul.f32 %v805, %v834
          %v845 = vmul.f32 %v806, %v834
          %v846 = vmul.f32 %v807, %v834
          %v847 = vmul.f32 %v808, %v834
          %v848 = vmul.f32 %v809, %v834
          %v849 = vmul.f32 %v810, %v834
          %v850 = vmul.f32 %v811, %v834
          %v851 = vmul.f32 %v812, %v834
          %v852 = vmul.f32 %v813, %v834
          %v853 = vmul.f32 %v814, %v834
          %v854 = vmul.f32 %v815, %v834
          %v855 = vmul.f32 %v816, %v834
          %v856 = vmul.f32 %v817, %v834
          %v857 = vmul.f32 %v818, %v834
          %v858 = vmul.f32 %v819, %v834
          %v859 = vmul.f32 %v820, %v834
          %v860 = vmul.f32 %v821, %v834
          %v861 = vmul.f32 %v822, %v834
          %v862 = vmul.f32 %v823, %v834
          %v863 = vmul.f32 %v824, %v834
          %v864 = vmul.f32 %v825, %v834
          %v865 = vmul.f32 %v826, %v834
          %v866 = vmul.f32 %v827, %v834
          %v867 = vmul.f32 %v828, %v834
          %v868 = vld [vmem:[#allocation9] sm:$0x1]
          %v870 = vlaneseq
          %v871 = vshrl.u32 %v870, 7
          %v872 = vsub.s32 0, %v871
          %v873 = vrot.slane %v868, %v872
          %v875 = vadd.f32 %v836, %v873
          %v876 = vadd.f32 %v837, %v873
          %v877 = vadd.f32 %v838, %v873
          %v878 = vadd.f32 %v839, %v873
          %v879 = vadd.f32 %v840, %v873
          %v880 = vadd.f32 %v841, %v873
          %v881 = vadd.f32 %v842, %v873
          %v882 = vadd.f32 %v843, %v873
          %v883 = vadd.f32 %v844, %v873
          %v884 = vadd.f32 %v845, %v873
          %v885 = vadd.f32 %v846, %v873
          %v886 = vadd.f32 %v847, %v873
          %v887 = vadd.f32 %v848, %v873
          %v888 = vadd.f32 %v849, %v873
          %v889 = vadd.f32 %v850, %v873
          %v890 = vadd.f32 %v851, %v873
          %v891 = vadd.f32 %v852, %v873
          %v892 = vadd.f32 %v853, %v873
          %v893 = vadd.f32 %v854, %v873
          %v894 = vadd.f32 %v855, %v873
          %v895 = vadd.f32 %v856, %v873
          %v896 = vadd.f32 %v857, %v873
          %v897 = vadd.f32 %v858, %v873
          %v898 = vadd.f32 %v859, %v873
          %v899 = vadd.f32 %v860, %v873
          %v900 = vadd.f32 %v861, %v873
          %v901 = vadd.f32 %v862, %v873
          %v902 = vadd.f32 %v863, %v873
          %v903 = vadd.f32 %v864, %v873
          %v904 = vadd.f32 %v865, %v873
          %v905 = vadd.f32 %v866, %v873
          %v906 = vadd.f32 %v867, %v873
          %v907 = vmax.f32 %v875, 0.0
          %v908 = vmax.f32 %v876, 0.0
          %v909 = vmax.f32 %v877, 0.0
          %v910 = vmax.f32 %v878, 0.0
          %v911 = vmax.f32 %v879, 0.0
          %v912 = vmax.f32 %v880, 0.0
          %v913 = vmax.f32 %v881, 0.0
          %v914 = vmax.f32 %v882, 0.0
          %v915 = vmax.f32 %v883, 0.0
          %v916 = vmax.f32 %v884, 0.0
          %v917 = vmax.f32 %v885, 0.0
          %v918 = vmax.f32 %v886, 0.0
          %v919 = vmax.f32 %v887, 0.0
          %v920 = vmax.f32 %v888, 0.0
          %v921 = vmax.f32 %v889, 0.0
          %v922 = vmax.f32 %v890, 0.0
          %v923 = vmax.f32 %v891, 0.0
          %v924 = vmax.f32 %v892, 0.0
          %v925 = vmax.f32 %v893, 0.0
          %v926 = vmax.f32 %v894, 0.0
          %v927 = vmax.f32 %v895, 0.0
          %v928 = vmax.f32 %v896, 0.0
          %v929 = vmax.f32 %v897, 0.0
          %v930 = vmax.f32 %v898, 0.0
          %v931 = vmax.f32 %v899, 0.0
          %v932 = vmax.f32 %v900, 0.0
          %v933 = vmax.f32 %v901, 0.0
          %v934 = vmax.f32 %v902, 0.0
          %v935 = vmax.f32 %v903, 0.0
          %v936 = vmax.f32 %v904, 0.0
          %v937 = vmax.f32 %v905, 0.0
          %v938 = vmax.f32 %v906, 0.0
          %v939 = vpack.c.bf16 %v908, %v907
          %v940 = vpack.c.bf16 %v910, %v909
          %v941 = vpack.c.bf16 %v912, %v911
          %v942 = vpack.c.bf16 %v914, %v913
          %v943 = vpack.c.bf16 %v916, %v915
          %v944 = vpack.c.bf16 %v918, %v917
          %v945 = vpack.c.bf16 %v920, %v919
          %v946 = vpack.c.bf16 %v922, %v921
          %v947 = vpack.c.bf16 %v924, %v923
          %v948 = vpack.c.bf16 %v926, %v925
          %v949 = vpack.c.bf16 %v928, %v927
          %v950 = vpack.c.bf16 %v930, %v929
          %v951 = vpack.c.bf16 %v932, %v931
          %v952 = vpack.c.bf16 %v934, %v933
          %v953 = vpack.c.bf16 %v936, %v935
          %v954 = vpack.c.bf16 %v938, %v937
          %v971 = vunpack.c.l.b16 %v939
          %v972 = vunpack.c.h.b16 %v939
          %v973 = vunpack.c.l.b16 %v940
          %v974 = vunpack.c.h.b16 %v940
          %v975 = vunpack.c.l.b16 %v941
          %v976 = vunpack.c.h.b16 %v941
          %v977 = vunpack.c.l.b16 %v942
          %v978 = vunpack.c.h.b16 %v942
          %v979 = vunpack.c.l.b16 %v943
          %v980 = vunpack.c.h.b16 %v943
          %v981 = vunpack.c.l.b16 %v944
          %v982 = vunpack.c.h.b16 %v944
          %v983 = vunpack.c.l.b16 %v945
          %v984 = vunpack.c.h.b16 %v945
          %v985 = vunpack.c.l.b16 %v946
          %v986 = vunpack.c.h.b16 %v946
          %v987 = vunpack.c.l.b16 %v947
          %v988 = vunpack.c.h.b16 %v947
          %v989 = vunpack.c.l.b16 %v948
          %v990 = vunpack.c.h.b16 %v948
          %v991 = vunpack.c.l.b16 %v949
          %v992 = vunpack.c.h.b16 %v949
          %v993 = vunpack.c.l.b16 %v950
          %v994 = vunpack.c.h.b16 %v950
          %v995 = vunpack.c.l.b16 %v951
          %v996 = vunpack.c.h.b16 %v951
          %v997 = vunpack.c.l.b16 %v952
          %v998 = vunpack.c.h.b16 %v952
          %v999 = vunpack.c.l.b16 %v953
          %v1000 = vunpack.c.h.b16 %v953
          %v1001 = vunpack.c.l.b16 %v954
          %v1002 = vunpack.c.h.b16 %v954
          %v1003 = vpack.c.b16 %v971, %v971
          %v1004 = vpack.c.b16 %v972, %v972
          %v1005 = vpack.c.b16 %v973, %v973
          %v1006 = vpack.c.b16 %v974, %v974
          %v1007 = vpack.c.b16 %v975, %v975
          %v1008 = vpack.c.b16 %v976, %v976
          %v1009 = vpack.c.b16 %v977, %v977
          %v1010 = vpack.c.b16 %v978, %v978
          %v1011 = vpack.c.b16 %v979, %v979
          %v1012 = vpack.c.b16 %v980, %v980
          %v1013 = vpack.c.b16 %v981, %v981
          %v1014 = vpack.c.b16 %v982, %v982
          %v1015 = vpack.c.b16 %v983, %v983
          %v1016 = vpack.c.b16 %v984, %v984
          %v1017 = vpack.c.b16 %v985, %v985
          %v1018 = vpack.c.b16 %v986, %v986
          %v1019 = vpack.c.b16 %v987, %v987
          %v1020 = vpack.c.b16 %v988, %v988
          %v1021 = vpack.c.b16 %v989, %v989
          %v1022 = vpack.c.b16 %v990, %v990
          %v1023 = vpack.c.b16 %v991, %v991
          %v1024 = vpack.c.b16 %v992, %v992
          %v1025 = vpack.c.b16 %v993, %v993
          %v1026 = vpack.c.b16 %v994, %v994
          %v1027 = vpack.c.b16 %v995, %v995
          %v1028 = vpack.c.b16 %v996, %v996
          %v1029 = vpack.c.b16 %v997, %v997
          %v1030 = vpack.c.b16 %v998, %v998
          %v1031 = vpack.c.b16 %v999, %v999
          %v1032 = vpack.c.b16 %v1000, %v1000
          %v1033 = vpack.c.b16 %v1001, %v1001
          %v1034 = vpack.c.b16 %v1002, %v1002
          %1067 = vst [vmem:[%s304] sm:$0xf] %v1003
          %1068 = vst [vmem:[%s304 + $0x4] sm:$0xf] %v1004
          %1069 = vst [vmem:[%s304 + $0x8] sm:$0xf] %v1005
          %1070 = vst [vmem:[%s304 + $0xc] sm:$0xf] %v1006
          %1071 = vst [vmem:[%s304 + $0x10] sm:$0xf] %v1007
          %1072 = vst [vmem:[%s304 + $0x14] sm:$0xf] %v1008
          %1073 = vst [vmem:[%s304 + $0x18] sm:$0xf] %v1009
          %1074 = vst [vmem:[%s304 + $0x1c] sm:$0xf] %v1010
          %1075 = vst [vmem:[%s304 + $0x20] sm:$0xf] %v1011
          %1076 = vst [vmem:[%s304 + $0x24] sm:$0xf] %v1012
          %1077 = vst [vmem:[%s304 + $0x28] sm:$0xf] %v1013
          %1078 = vst [vmem:[%s304 + $0x2c] sm:$0xf] %v1014
          %1079 = vst [vmem:[%s304 + $0x30] sm:$0xf] %v1015
          %1080 = vst [vmem:[%s304 + $0x34] sm:$0xf] %v1016
          %1081 = vst [vmem:[%s304 + $0x38] sm:$0xf] %v1017
          %1082 = vst [vmem:[%s304 + $0x3c] sm:$0xf] %v1018
          %1083 = vst [vmem:[%s304 + $0x40] sm:$0xf] %v1019
          %1084 = vst [vmem:[%s304 + $0x44] sm:$0xf] %v1020
          %1085 = vst [vmem:[%s304 + $0x48] sm:$0xf] %v1021
          %1086 = vst [vmem:[%s304 + $0x4c] sm:$0xf] %v1022
          %1087 = vst [vmem:[%s304 + $0x50] sm:$0xf] %v1023
          %1088 = vst [vmem:[%s304 + $0x54] sm:$0xf] %v1024
          %1089 = vst [vmem:[%s304 + $0x58] sm:$0xf] %v1025
          %1090 = vst [vmem:[%s304 + $0x5c] sm:$0xf] %v1026
          %1091 = vst [vmem:[%s304 + $0x60] sm:$0xf] %v1027
          %1092 = vst [vmem:[%s304 + $0x64] sm:$0xf] %v1028
          %1093 = vst [vmem:[%s304 + $0x68] sm:$0xf] %v1029
          %1094 = vst [vmem:[%s304 + $0x6c] sm:$0xf] %v1030
          %1095 = vst [vmem:[%s304 + $0x70] sm:$0xf] %v1031
          %1096 = vst [vmem:[%s304 + $0x74] sm:$0xf] %v1032
          %1097 = vst [vmem:[%s304 + $0x78] sm:$0xf] %v1033
          %1098 = vst [vmem:[%s304 + $0x7c] sm:$0xf] %v1034
        $region60: #{tpu_custom_call.1} parent=35 // pred_fallthru
          _
        %s1099 = sand.u32 %s160, 1
        %s1100 = scalar_lea.sflag [#allocation5], %s1099
        %s1101 = sand.u32 %s160, 1
        %s1102 = smul.addr %s1101, 128
        %s1103 = scalar_lea.vmem [#allocation11], %s1102
        // Predicated region
        $region61: #{tpu_custom_call.1} parent=35 // pred_check
          %p1104 = pneg %p170
        $region62: #{tpu_custom_call.1} parent=35 // pred_check_branch
          %1106 = sbr.rel (%p1104) target = $region64
        $region63: #{tpu_custom_call.1} parent=35 // pred_region
          %s1107 = smul.u32 32, %s28
          %s1109 = ssub.s32 2048, 2048
          %1110 = vsyncadd %s1100, %s1109
          %s1111 = sadd.s32 %s29, %s1107
          %s1112 = smul.addr %s1111, 64
          %s1113 = scalar_lea.hbm %s4, %s1112
          %s1114 = sshll.u32 %s1103, 4
          %s1115 = int_to_ptr.vmem [resolvable:$true] %s1114
          %1120 = dma.vmem_to_hbm [thread:$0]  %s1115, 2048, %s1113, %s1100, 64, 64, 4
        $region64: #{tpu_custom_call.1} parent=35 // pred_fallthru
          _
      $region36: #{tpu_custom_call.1} parent=5 // pred_fallthru
        _
      %p1121 = scmp.le.s32.totalorder 2, %s18
      // Predicated region
      $region65: #{tpu_custom_call.1} parent=5 // pred_check
        %p1122 = pneg %p1121
      $region66: #{tpu_custom_call.1} parent=5 // pred_check_branch
        %1124 = sbr.rel (%p1122) target = $region68
      $region67: #{tpu_custom_call.1} parent=5 // pred_region
        %s1125 = ssub.s32 %s18, 2
        // Predicated region
        $region69: #{tpu_custom_call.1} parent=67 // pred_check
          %p1126 = pneg %p176
        $region70: #{tpu_custom_call.1} parent=67 // pred_check_branch
          %1128 = sbr.rel (%p1126) target = $region72
        $region71: #{tpu_custom_call.1} parent=67 // pred_region
          %s1129 = sand.u32 %s161, 1
          %s1130 = scalar_lea.sflag [#allocation5], %s1129
          %s1131 = sand.u32 %s161, 1
          %s1132 = smul.addr %s1131, 128
          %s1133 = scalar_lea.vmem [#allocation11], %s1132
          %1134 = dma.done %s1130, 2048
        $region72: #{tpu_custom_call.1} parent=67 // pred_fallthru
          _
      $region68: #{tpu_custom_call.1} parent=5 // pred_fallthru
        _
    $region6: #{tpu_custom_call.1} parent=1 // loop_footer
      %s22 = sadd.s32 1, %s18
    $region7: #{tpu_custom_call.1} parent=1 // loop_footer_branch
      %17 = sbr.rel target = $region3
    $region8: #{tpu_custom_call.1} parent=1 // loop_exit
      _
    %1135 = vsyncpa [#allocation4], 1
    %s1136 = scalar_lea.sflag [#allocation4], 1
    %1137 = vsyncpa %s1136, 1
    %1138 = vsyncpa [#allocation7], 1
    %1139 = vsyncpa [#allocation10], 1
    %1140 = vsyncpa [#allocation5], 1
    %s1141 = scalar_lea.sflag [#allocation5], 1
    %1142 = vsyncpa %s1141, 1

</llo_original>
